<compile_context>
chip_gen: v5e
topology: v5e:2x2
jax: 0.10.0
libtpu: 0.0.40
codegen_flags: <defaults>
</compile_context>

<pallas_src>
import functools

import jax
import jax.numpy as jnp
from jax.experimental import pallas as pl
from jax.experimental.pallas import tpu as pltpu

NEG_INF = -1e30


def _default_vmem_limit():
    # Per-generation scoped-VMEM limit: ~75% of physical, capped at 100 MiB.
    # (v5e/v6e: 96 MiB, v7x: 48 MiB.)
    try:
        cap = int(pltpu.get_tpu_info().vmem_capacity_bytes)
    except Exception:
        cap = 128 * 1024 * 1024
    return min((cap * 3) // 4, 100 * 1024 * 1024)


_VMEM_LIMIT = _default_vmem_limit()


def _batch_split(B):
    """Number of batch blocks (2 when possible -> both v7x TensorCores busy)."""
    nb = 2 if (B % 2 == 0 and B > 1) else 1
    return nb, B // nb


# --------------------------------------------------------------------------
# Kernel 1: SeqAttnMatch (+ optional fused residual blend), batch-gridded
# --------------------------------------------------------------------------
def _seq_attn_kernel(blend_weight, x_ref, y_ref, ymask_ref, w_ref, b_ref,
                     out_ref):
    # x: (bb, A, D) bf16   y: (bb, P, D) bf16   ymask: (bb, 1, P) f32 additive
    # w: (D, D) bf16 (in,out layout)            b: (1, D) f32
    # out: (bb, A, D) bf16
    bb, A, D = x_ref.shape
    P = y_ref.shape[1]
    x = x_ref[...]
    y = y_ref[...]
    w = w_ref[...]
    b = b_ref[...]

    # shared Linear + ReLU as collapsed 2-D MXU matmuls (M = bb*A / bb*P rows,
    # no per-batch weight broadcast), f32 accumulate.
    x_proj = jnp.maximum(
        jnp.dot(x.reshape(bb * A, D), w,
                preferred_element_type=jnp.float32) + b, 0.0)
    y_proj = jnp.maximum(
        jnp.dot(y.reshape(bb * P, D), w,
                preferred_element_type=jnp.float32) + b, 0.0)
    x_proj = x_proj.reshape(bb, A, D).astype(jnp.bfloat16)
    y_proj = y_proj.reshape(bb, P, D).astype(jnp.bfloat16)

    # attention scores + masked softmax over the passage axis (lane reduction)
    scores = jnp.einsum("bad,bpd->bap", x_proj, y_proj,
                        preferred_element_type=jnp.float32)
    scores = scores + ymask_ref[...]
    scores = scores - jnp.max(scores, axis=-1, keepdims=True)
    e = jnp.exp(scores)
    alpha = e * pl.reciprocal(jnp.sum(e, axis=-1, keepdims=True), approx=True)

    out = jnp.einsum("bap,bpd->bad", alpha.astype(jnp.bfloat16), y,
                     preferred_element_type=jnp.float32)
    if blend_weight is not None:          # fused `match*w + answer*(1-w)`
        out = out * blend_weight + x.astype(jnp.float32) * (1.0 - blend_weight)
    out_ref[...] = out.astype(out_ref.dtype)


def seq_attn_match(x, y, y_mask, W, b, blend_weight=None):
    """x: (B, A, D) attends over y: (B, P, D); y_mask: (B, P), 1 = pad.
    Returns bf16 (B, A, D); optionally blended with x (fused)."""
    B, A, D = x.shape
    P = y.shape[1]
    nb, bb = _batch_split(B)
    ymask_add = (y_mask.astype(jnp.float32) * NEG_INF).reshape(B, 1, P)
    Wt = W.T.astype(jnp.bfloat16)                 # (D_in, D_out)
    b2 = b.reshape(1, D).astype(jnp.float32)
    kernel = functools.partial(_seq_attn_kernel, blend_weight)
    return pl.pallas_call(
        kernel,
        out_shape=jax.ShapeDtypeStruct((B, A, D), jnp.bfloat16),
        grid=(nb,),
        in_specs=[pl.BlockSpec((bb, A, D), lambda i: (i, 0, 0)),
                  pl.BlockSpec((bb, P, D), lambda i: (i, 0, 0)),
                  pl.BlockSpec((bb, 1, P), lambda i: (i, 0, 0)),
                  pl.BlockSpec((D, D), lambda i: (0, 0)),
                  pl.BlockSpec((1, D), lambda i: (0, 0))],
        out_specs=pl.BlockSpec((bb, A, D), lambda i: (i, 0, 0)),
        compiler_params=pltpu.CompilerParams(
            dimension_semantics=("parallel",), vmem_limit_bytes=_VMEM_LIMIT),
    )(x.astype(jnp.bfloat16), y.astype(jnp.bfloat16), ymask_add, Wt, b2)


# --------------------------------------------------------------------------
# Kernel 2: single-layer bidirectional LSTM (StackedBRNN), whole batch,
#           time-major flattened (T*B, .) layout, fwd/bwd fused per step.
# --------------------------------------------------------------------------
def _bilstm_kernel(n_in, T, B, *refs):
    # inputs : n_in x segments (T*B, Di) bf16 (time-major flattened),
    #          n_in fwd wih parts (Di,4H) bf16, n_in bwd wih parts (Di,4H) bf16,
    #          whh_f/whh_b (H,4H) bf16, b_f/b_b (1,4H) f32
    # output : (T*B, 2H) bf16
    # scratch: gxf,gxb (T*B,4H) bf16 ; hbf,hbb (T*B,H) bf16
    xs = refs[0:n_in]
    wfs = refs[n_in:2 * n_in]
    wbs = refs[2 * n_in:3 * n_in]
    (whhf_ref, whhb_ref, bf_ref, bb_ref, out_ref,
     gxf_ref, gxb_ref, hbf_ref, hbb_ref) = refs[3 * n_in:]

    H = whhf_ref.shape[0]

    # 1) input->gate pre-activations for ALL timesteps, once, as collapsed
    #    2-D MXU matmuls (wih split row-wise per segment -> no concat tensor,
    #    no per-batch weight broadcast).
    gx_f = bf_ref[...]                      # (1,4H) f32, broadcasts on add
    gx_b = bb_ref[...]
    for x_r, wf_r, wb_r in zip(xs, wfs, wbs):
        x2 = x_r[...]                       # (T*B, Di) bf16
        gx_f = gx_f + jnp.dot(x2, wf_r[...],
                              preferred_element_type=jnp.float32)
        gx_b = gx_b + jnp.dot(x2, wb_r[...],
                              preferred_element_type=jnp.float32)
    gxf_ref[...] = gx_f.astype(gxf_ref.dtype)     # bf16 scratch (halved VMEM)
    gxb_ref[...] = gx_b.astype(gxb_ref.dtype)

    whh_f = whhf_ref[...]                   # (H,4H) bf16, hoisted
    whh_b = whhb_ref[...]

    def cell(g, h, c, whh):
        # g: (B,4H) bf16 input-path preact;  h,c: (B,H) f32
        gates = g.astype(jnp.float32) + jnp.dot(
            h.astype(jnp.bfloat16), whh, preferred_element_type=jnp.float32)
        i_f = jax.nn.sigmoid(gates[:, 0:2 * H])   # merged i/f sigmoid (one EUP slab)
        i_g = i_f[:, 0:H]
        f_g = i_f[:, H:2 * H]
        g_g = jnp.tanh(gates[:, 2 * H:3 * H])
        o_g = jax.nn.sigmoid(gates[:, 3 * H:4 * H])
        c_new = f_g * c + i_g * g_g
        h_new = o_g * jnp.tanh(c_new)
        return h_new, c_new

    z = jnp.zeros((B, H), jnp.float32)

    def body(i, carry):
        hf, cf, hb, cb = carry
        rf = i * B                              # fwd timestep row offset
        rb = (T - 1 - i) * B                    # bwd timestep row offset
        gf = gxf_ref[pl.ds(rf, B), :]           # contiguous (B,4H) slab
        gb = gxb_ref[pl.ds(rb, B), :]
        hf, cf = cell(gf, hf, cf, whh_f)        # two independent dep-chains
        hb, cb = cell(gb, hb, cb, whh_b)
        hbf_ref[pl.ds(rf, B), :] = hf.astype(hbf_ref.dtype)   # VMEM scratch
        hbb_ref[pl.ds(rb, B), :] = hb.astype(hbb_ref.dtype)
        return hf, cf, hb, cb

    jax.lax.fori_loop(0, T, body, (z, z, z, z), unroll=True)

    # 2) ONE lane-dense bulk store of the whole output (no per-step HBM writes)
    out_ref[...] = jnp.concatenate(
        [hbf_ref[...], hbb_ref[...]], axis=-1).astype(out_ref.dtype)


def bilstm(xs, lp):
    """xs: list of (B, T, D_i) segments (implicit feature concat) -> bf16
    (B, T, 2H). Mask ignored (StackedBRNN padding=False semantics)."""
    B, T = xs[0].shape[0], xs[0].shape[1]
    dims = [int(x.shape[2]) for x in xs]
    H = int(lp["whh_f"].shape[1])

    # time-major flattened (T*B, Di) views so every in-kernel matmul is 2-D
    xs_tm = [jnp.transpose(x, (1, 0, 2)).reshape(T * B, d).astype(jnp.bfloat16)
             for x, d in zip(xs, dims)]

    wihf_t = lp["wih_f"].T.astype(jnp.bfloat16)   # (sum Di, 4H)
    wihb_t = lp["wih_b"].T.astype(jnp.bfloat16)
    offs = [0]
    for d in dims:
        offs.append(offs[-1] + d)
    wf_parts = [wihf_t[offs[i]:offs[i + 1]] for i in range(len(xs))]
    wb_parts = [wihb_t[offs[i]:offs[i + 1]] for i in range(len(xs))]

    whhf = lp["whh_f"].T.astype(jnp.bfloat16)     # (H, 4H) bf16 MXU operand
    whhb = lp["whh_b"].T.astype(jnp.bfloat16)
    bf = lp["b_f"].reshape(1, 4 * H).astype(jnp.float32)
    bb = lp["b_b"].reshape(1, 4 * H).astype(jnp.float32)

    kernel = functools.partial(_bilstm_kernel, len(xs), T, B)
    out = pl.pallas_call(
        kernel,
        out_shape=jax.ShapeDtypeStruct((T * B, 2 * H), jnp.bfloat16),
        scratch_shapes=[pltpu.VMEM((T * B, 4 * H), jnp.bfloat16),
                        pltpu.VMEM((T * B, 4 * H), jnp.bfloat16),
                        pltpu.VMEM((T * B, H), jnp.bfloat16),
                        pltpu.VMEM((T * B, H), jnp.bfloat16)],
        compiler_params=pltpu.CompilerParams(vmem_limit_bytes=_VMEM_LIMIT),
    )(*xs_tm, *wf_parts, *wb_parts, whhf, whhb, bf, bb)
    return jnp.transpose(out.reshape(T, B, 2 * H), (1, 0, 2))   # (B,T,2H) bf16


# --------------------------------------------------------------------------
# Kernel 3: answer-independent ScoreLayer work, hoisted: self-attentive
#           pooling of each passage_i + its bilinear projection, all three
#           scorers in one kernel invocation.
# --------------------------------------------------------------------------
def _passage_pool_kernel(p1_ref, p2_ref, p3_ref, pmask_ref, wp_ref, wbil_ref,
                         q_ref):
    # p*: (bb,P,D) bf16  pmask: (bb,1,P) f32 additive
    # wp: (3,1,D) bf16   wbil: (3,D,D) bf16  q: (bb,3,D) f32
    bb, P, D = p1_ref.shape
    mask = pmask_ref[...]
    wp_all = wp_ref[...]
    wbil_all = wbil_ref[...]
    qs = []
    for k, p_ref in enumerate((p1_ref, p2_ref, p3_ref)):
        seq = p_ref[...]
        w_b = jnp.broadcast_to(wp_all[k:k + 1], (bb, 1, D))   # tiny broadcast
        s = jnp.einsum("bqd,bld->bql", w_b, seq,
                       preferred_element_type=jnp.float32) + mask
        s = s - jnp.max(s, axis=-1, keepdims=True)
        e = jnp.exp(s)
        alpha = e * pl.reciprocal(jnp.sum(e, axis=-1, keepdims=True),
                                  approx=True)
        pvec = jnp.einsum("bql,bld->bqd", alpha.astype(jnp.bfloat16), seq,
                          preferred_element_type=jnp.float32)      # (bb,1,D)
        # de-broadcast bilinear: (bb,D) x (D,D) bf16 MXU matmul, f32 acc
        qk = jnp.dot(pvec.reshape(bb, D).astype(jnp.bfloat16), wbil_all[k],
                     preferred_element_type=jnp.float32)           # (bb,D)
        qs.append(qk.reshape(bb, 1, D))
    q_ref[...] = jnp.concatenate(qs, axis=1)                        # one store


def passage_pool(p1, p2, p3, p_mask, s1, s2, s3):
    B, P, D = p1.shape
    nb, bb = _batch_split(B)
    pmask_add = (p_mask.astype(jnp.float32) * NEG_INF).reshape(B, 1, P)
    wp = jnp.stack([s1["wp"], s2["wp"], s3["wp"]]).reshape(3, 1, D)
    wp = wp.astype(jnp.bfloat16)
    wbil = jnp.stack([s1["wbil"], s2["wbil"], s3["wbil"]]).astype(jnp.bfloat16)
    return pl.pallas_call(
        _passage_pool_kernel,
        out_shape=jax.ShapeDtypeStruct((B, 3, D), jnp.float32),
        grid=(nb,),
        in_specs=[pl.BlockSpec((bb, P, D), lambda i: (i, 0, 0)),
                  pl.BlockSpec((bb, P, D), lambda i: (i, 0, 0)),
                  pl.BlockSpec((bb, P, D), lambda i: (i, 0, 0)),
                  pl.BlockSpec((bb, 1, P), lambda i: (i, 0, 0)),
                  pl.BlockSpec((3, 1, D), lambda i: (0, 0, 0)),
                  pl.BlockSpec((3, D, D), lambda i: (0, 0, 0))],
        out_specs=pl.BlockSpec((bb, 3, D), lambda i: (i, 0, 0)),
        compiler_params=pltpu.CompilerParams(
            dimension_semantics=("parallel",), vmem_limit_bytes=_VMEM_LIMIT),
    )(p1.astype(jnp.bfloat16), p2.astype(jnp.bfloat16),
      p3.astype(jnp.bfloat16), pmask_add, wp, wbil)


# --------------------------------------------------------------------------
# Kernel 4: per-answer half of ScoreLayer (answer pooling + dot with the
#           precomputed passage/bilinear vector).
# --------------------------------------------------------------------------
def _answer_score_kernel(a_ref, amask_ref, wa_ref, q_ref, out_ref):
    # a: (bb,A,D) bf16  amask: (bb,1,A) f32  wa: (1,1,D) bf16
    # q: (bb,1,D) f32   out: (bb,1,1) f32
    bb, A, D = a_ref.shape
    a = a_ref[...]
    w_b = jnp.broadcast_to(wa_ref[...], (bb, 1, D))
    s = jnp.einsum("bqd,bld->bql", w_b, a,
                   preferred_element_type=jnp.float32) + amask_ref[...]
    s = s - jnp.max(s, axis=-1, keepdims=True)
    e = jnp.exp(s)
    alpha = e * pl.reciprocal(jnp.sum(e, axis=-1, keepdims=True), approx=True)
    a_vec = jnp.einsum("bql,bld->bqd", alpha.astype(jnp.bfloat16), a,
                       preferred_element_type=jnp.float32)          # (bb,1,D)
    out_ref[...] = jnp.sum(a_vec * q_ref[...], axis=-1,
                           keepdims=True).astype(out_ref.dtype)      # (bb,1,1)


def answer_score(answer, a_mask, wa, qvec):
    B, A, D = answer.shape
    nb, bb = _batch_split(B)
    amask_add = (a_mask.astype(jnp.float32) * NEG_INF).reshape(B, 1, A)
    wa3 = wa.reshape(1, 1, D).astype(jnp.bfloat16)
    out = pl.pallas_call(
        _answer_score_kernel,
        out_shape=jax.ShapeDtypeStruct((B, 1, 1), jnp.float32),
        grid=(nb,),
        in_specs=[pl.BlockSpec((bb, A, D), lambda i: (i, 0, 0)),
                  pl.BlockSpec((bb, 1, A), lambda i: (i, 0, 0)),
                  pl.BlockSpec((1, 1, D), lambda i: (0, 0, 0)),
                  pl.BlockSpec((bb, 1, D), lambda i: (i, 0, 0))],
        out_specs=pl.BlockSpec((bb, 1, 1), lambda i: (i, 0, 0)),
        compiler_params=pltpu.CompilerParams(
            dimension_semantics=("parallel",), vmem_limit_bytes=_VMEM_LIMIT),
    )(answer.astype(jnp.bfloat16), amask_add, wa3, qvec.astype(jnp.float32))
    return out.reshape(B)


# --------------------------------------------------------------------------
# AnswerLayer forward (glue in plain JAX, hot paths in the kernels above)
# --------------------------------------------------------------------------
def answer_layer_forward(passageinfo, passage_mask, answer, answer_mask,
                         params, score_type=0):
    passage, passage1, passage2, passage3 = passageinfo

    # hoisted off the critical path: answer-independent passage pooling +
    # bilinear projection for all three scorers, one kernel.
    q = passage_pool(passage1, passage2, passage3, passage_mask,
                     params["s1"], params["s2"], params["s3"])   # (B,3,2H)

    # blend `match*0.3 + answer*0.7` fused into the attention kernel
    answer0 = seq_attn_match(answer, passage, passage_mask,
                             params["m1"]["W"], params["m1"]["b"],
                             blend_weight=0.3)
    answer1 = bilstm([answer0], params["lstm1"])
    score1 = answer_score(answer1, answer_mask, params["s1"]["wa"],
                          q[:, 0:1, :])

    match = seq_attn_match(answer1, passage1, passage_mask,
                           params["m2"]["W"], params["m2"]["b"])
    answer2 = bilstm([answer, answer1, match], params["lstm2"])
    score2 = answer_score(answer2, answer_mask, params["s2"]["wa"],
                          q[:, 1:2, :])

    match = seq_attn_match(answer2, passage2, passage_mask,
                           params["m3"]["W"], params["m3"]["b"])
    answer3 = bilstm([answer, answer1, answer2, match], params["lstm3"])
    score3 = answer_score(answer3, answer_mask, params["s3"]["wa"],
                          q[:, 2:3, :])

    if score_type == 0:
        return score1 + score2 + score3
    elif score_type == 1:
        return score1
    elif score_type == 2:
        return score2
    else:
        return score3


# --------------------------------------------------------------------------
# Deterministic parameter init (shapes implied by AnswerLayer.__init__)
# --------------------------------------------------------------------------
def _p(seed, shape, scale=0.1):
    return scale * jax.random.normal(jax.random.PRNGKey(seed), shape,
                                     jnp.float32)


def init_params(emb, h):
    d2 = 2 * h

    def lstm_p(k0, din):
        return {
            "wih_f": _p(k0 + 0, (4 * h, din)), "whh_f": _p(k0 + 1, (4 * h, h)),
            "b_f": _p(k0 + 2, (4 * h,)),
            "wih_b": _p(k0 + 3, (4 * h, din)), "whh_b": _p(k0 + 4, (4 * h, h)),
            "b_b": _p(k0 + 5, (4 * h,)),
        }

    def score_p(k0):
        return {"wp": _p(k0, (d2,)), "wa": _p(k0 + 1, (d2,)),
                "wbil": _p(k0 + 2, (d2, d2))}

    return {
        "m1": {"W": _p(1, (emb, emb)), "b": _p(2, (emb,))},
        "m2": {"W": _p(3, (d2, d2)), "b": _p(4, (d2,))},
        "m3": {"W": _p(5, (d2, d2)), "b": _p(6, (d2,))},
        "lstm1": lstm_p(10, emb),
        "lstm2": lstm_p(20, d2 * 2 + emb),
        "lstm3": lstm_p(30, d2 * 3 + emb),
        "s1": score_p(40), "s2": score_p(43), "s3": score_p(46),
    }


# --------------------------------------------------------------------------
if __name__ == "__main__":
    B, P, A, EMB, H = 2, 16, 8, 32, 16          # batch, passage len, answer len
    D2 = 2 * H                                   # BiLSTM output dim

    key = jax.random.PRNGKey(0)
    keys = jax.random.split(key, 8)
    passage = jax.random.normal(keys[0], (B, P, EMB), jnp.float32)
    passage1 = jax.random.normal(keys[1], (B, P, D2), jnp.float32)
    passage2 = jax.random.normal(keys[2], (B, P, D2), jnp.float32)
    passage3 = jax.random.normal(keys[3], (B, P, D2), jnp.float32)
    answer = jax.random.normal(keys[4], (B, A, EMB), jnp.float32)

    passage_mask = jnp.zeros((B, P), jnp.float32).at[1, 13:].set(1.0)  # 1 = pad
    answer_mask = jnp.zeros((B, A), jnp.float32).at[1, 6:].set(1.0)

    params = init_params(EMB, H)

    out = answer_layer_forward(
        (passage, passage1, passage2, passage3),
        passage_mask, answer, answer_mask, params, score_type=0)
    out = jax.block_until_ready(out)

    assert out.shape == (B,)
    assert bool(jnp.all(jnp.isfinite(out)))
    print("KERNEL_OK")
</pallas_src>

<mosaic_0001>
module attributes {stable_mosaic.version = 11 : i64} {
  func.func @_passage_pool_kernel(%arg0: i32, %arg1: memref<1x16x32xbf16, #tpu.memory_space<vmem>>, %arg2: memref<1x16x32xbf16, #tpu.memory_space<vmem>>, %arg3: memref<1x16x32xbf16, #tpu.memory_space<vmem>>, %arg4: memref<1x1x16xf32, #tpu.memory_space<vmem>>, %arg5: memref<3x1x32xbf16, #tpu.memory_space<vmem>>, %arg6: memref<3x32x32xbf16, #tpu.memory_space<vmem>>, %arg7: memref<1x3x32xf32, #tpu.memory_space<vmem>>) attributes {dimension_semantics = [#tpu.dimension_semantics<parallel>], iteration_bounds = array<i64: 2>, scalar_prefetch = 0 : i64, scratch_operands = 0 : i64, tpu.core_type = #tpu.core_type<tc>, window_params = [{transform_indices = @transform_0, window_bounds = array<i64: 1, 16, 32>}, {transform_indices = @transform_1, window_bounds = array<i64: 1, 16, 32>}, {transform_indices = @transform_2, window_bounds = array<i64: 1, 16, 32>}, {transform_indices = @transform_3, window_bounds = array<i64: 1, 1, 16>}, {pipeline_mode = #tpu.pipeline_mode<synchronous>, transform_indices = @transform_4, window_bounds = array<i64: 3, 1, 32>}, {pipeline_mode = #tpu.pipeline_mode<synchronous>, transform_indices = @transform_5, window_bounds = array<i64: 3, 32, 32>}, {transform_indices = @transform_6, window_bounds = array<i64: 1, 3, 32>}]} {
    %c0 = arith.constant 0 : index
    %c0_0 = arith.constant 0 : index
    %c0_1 = arith.constant 0 : index
    %0 = vector.load %arg4[%c0, %c0_0, %c0_1] : memref<1x1x16xf32, #tpu.memory_space<vmem>>, vector<1x1x16xf32>
    %c0_2 = arith.constant 0 : index
    %c0_3 = arith.constant 0 : index
    %c0_4 = arith.constant 0 : index
    %1 = vector.load %arg5[%c0_2, %c0_3, %c0_4] : memref<3x1x32xbf16, #tpu.memory_space<vmem>>, vector<3x1x32xbf16>
    %c0_5 = arith.constant 0 : index
    %c0_6 = arith.constant 0 : index
    %c0_7 = arith.constant 0 : index
    %2 = vector.load %arg6[%c0_5, %c0_6, %c0_7] : memref<3x32x32xbf16, #tpu.memory_space<vmem>>, vector<3x32x32xbf16>
    %c0_8 = arith.constant 0 : index
    %c0_9 = arith.constant 0 : index
    %c0_10 = arith.constant 0 : index
    %3 = vector.load %arg1[%c0_8, %c0_9, %c0_10] : memref<1x16x32xbf16, #tpu.memory_space<vmem>>, vector<1x16x32xbf16>
    %4 = vector.extract_strided_slice %1 {offsets = [0, 0, 0], sizes = [1, 1, 32], strides = [1, 1, 1]} : vector<3x1x32xbf16> to vector<1x1x32xbf16>
    "tpu.trace_start"() <{level = 10 : i32, message = "bqd,bld->bql"}> : () -> ()
    %cst = arith.constant dense<0.000000e+00> : vector<1x1x16xf32>
    %5 = tpu.matmul %4, %3, %cst {dimension_numbers = #tpu.dot_dimension_numbers<[2], [2], [1], [1], [0, 0, 0, 1, 1, 1], [0], [0]>} : vector<1x1x32xbf16>, vector<1x16x32xbf16>, vector<1x1x16xf32> -> vector<1x1x16xf32>
    "tpu.trace_stop"() : () -> ()
    %6 = arith.addf %5, %0 : vector<1x1x16xf32>
    %cst_11 = arith.constant dense<0xFF800000> : vector<1x1xf32>
    %7 = vector.multi_reduction <maximumf>, %6, %cst_11 [2] : vector<1x1x16xf32> to vector<1x1xf32>
    %8 = vector.shape_cast %7 : vector<1x1xf32> to vector<1x1x1xf32>
    %9 = vector.broadcast %8 : vector<1x1x1xf32> to vector<1x1x16xf32>
    %10 = arith.subf %6, %9 : vector<1x1x16xf32>
    %11 = math.exp %10 : vector<1x1x16xf32>
    %cst_12 = arith.constant dense<0.000000e+00> : vector<1x1xf32>
    %12 = vector.multi_reduction <add>, %11, %cst_12 [2] : vector<1x1x16xf32> to vector<1x1xf32>
    %13 = vector.shape_cast %12 : vector<1x1xf32> to vector<1x1x1xf32>
    %14 = tpu.reciprocal %13 {approx = true} : vector<1x1x1xf32> -> vector<1x1x1xf32>
    %15 = vector.broadcast %14 : vector<1x1x1xf32> to vector<1x1x16xf32>
    %16 = arith.mulf %11, %15 : vector<1x1x16xf32>
    %17 = arith.truncf %16 : vector<1x1x16xf32> to vector<1x1x16xbf16>
    "tpu.trace_start"() <{level = 10 : i32, message = "bql,bld->bqd"}> : () -> ()
    %cst_13 = arith.constant dense<0.000000e+00> : vector<1x1x32xf32>
    %18 = tpu.matmul %17, %3, %cst_13 {dimension_numbers = #tpu.dot_dimension_numbers<[2], [1], [1], [2], [0, 0, 0, 1, 1, 2], [0], [0]>} : vector<1x1x16xbf16>, vector<1x16x32xbf16>, vector<1x1x32xf32> -> vector<1x1x32xf32>
    "tpu.trace_stop"() : () -> ()
    %19 = vector.shape_cast %18 : vector<1x1x32xf32> to vector<1x32xf32>
    %20 = arith.truncf %19 : vector<1x32xf32> to vector<1x32xbf16>
    %21 = vector.extract_strided_slice %2 {offsets = [0, 0, 0], sizes = [1, 32, 32], strides = [1, 1, 1]} : vector<3x32x32xbf16> to vector<1x32x32xbf16>
    %22 = vector.shape_cast %21 : vector<1x32x32xbf16> to vector<32x32xbf16>
    %cst_14 = arith.constant dense<0.000000e+00> : vector<1x32xf32>
    %23 = tpu.matmul %20, %22, %cst_14 {dimension_numbers = #tpu.dot_dimension_numbers<[1], [0], [0], [1], [0, 0, 1, 1], [], []>} : vector<1x32xbf16>, vector<32x32xbf16>, vector<1x32xf32> -> vector<1x32xf32>
    %24 = vector.shape_cast %23 : vector<1x32xf32> to vector<1x1x32xf32>
    %c0_15 = arith.constant 0 : index
    %c0_16 = arith.constant 0 : index
    %c0_17 = arith.constant 0 : index
    %25 = vector.load %arg2[%c0_15, %c0_16, %c0_17] : memref<1x16x32xbf16, #tpu.memory_space<vmem>>, vector<1x16x32xbf16>
    %26 = vector.extract_strided_slice %1 {offsets = [1, 0, 0], sizes = [1, 1, 32], strides = [1, 1, 1]} : vector<3x1x32xbf16> to vector<1x1x32xbf16>
    "tpu.trace_start"() <{level = 10 : i32, message = "bqd,bld->bql"}> : () -> ()
    %cst_18 = arith.constant dense<0.000000e+00> : vector<1x1x16xf32>
    %27 = tpu.matmul %26, %25, %cst_18 {dimension_numbers = #tpu.dot_dimension_numbers<[2], [2], [1], [1], [0, 0, 0, 1, 1, 1], [0], [0]>} : vector<1x1x32xbf16>, vector<1x16x32xbf16>, vector<1x1x16xf32> -> vector<1x1x16xf32>
    "tpu.trace_stop"() : () -> ()
    %28 = arith.addf %27, %0 : vector<1x1x16xf32>
    %cst_19 = arith.constant dense<0xFF800000> : vector<1x1xf32>
    %29 = vector.multi_reduction <maximumf>, %28, %cst_19 [2] : vector<1x1x16xf32> to vector<1x1xf32>
    %30 = vector.shape_cast %29 : vector<1x1xf32> to vector<1x1x1xf32>
    %31 = vector.broadcast %30 : vector<1x1x1xf32> to vector<1x1x16xf32>
    %32 = arith.subf %28, %31 : vector<1x1x16xf32>
    %33 = math.exp %32 : vector<1x1x16xf32>
    %cst_20 = arith.constant dense<0.000000e+00> : vector<1x1xf32>
    %34 = vector.multi_reduction <add>, %33, %cst_20 [2] : vector<1x1x16xf32> to vector<1x1xf32>
    %35 = vector.shape_cast %34 : vector<1x1xf32> to vector<1x1x1xf32>
    %36 = tpu.reciprocal %35 {approx = true} : vector<1x1x1xf32> -> vector<1x1x1xf32>
    %37 = vector.broadcast %36 : vector<1x1x1xf32> to vector<1x1x16xf32>
    %38 = arith.mulf %33, %37 : vector<1x1x16xf32>
    %39 = arith.truncf %38 : vector<1x1x16xf32> to vector<1x1x16xbf16>
    "tpu.trace_start"() <{level = 10 : i32, message = "bql,bld->bqd"}> : () -> ()
    %cst_21 = arith.constant dense<0.000000e+00> : vector<1x1x32xf32>
    %40 = tpu.matmul %39, %25, %cst_21 {dimension_numbers = #tpu.dot_dimension_numbers<[2], [1], [1], [2], [0, 0, 0, 1, 1, 2], [0], [0]>} : vector<1x1x16xbf16>, vector<1x16x32xbf16>, vector<1x1x32xf32> -> vector<1x1x32xf32>
    "tpu.trace_stop"() : () -> ()
    %41 = vector.shape_cast %40 : vector<1x1x32xf32> to vector<1x32xf32>
    %42 = arith.truncf %41 : vector<1x32xf32> to vector<1x32xbf16>
    %43 = vector.extract_strided_slice %2 {offsets = [1, 0, 0], sizes = [1, 32, 32], strides = [1, 1, 1]} : vector<3x32x32xbf16> to vector<1x32x32xbf16>
    %44 = vector.shape_cast %43 : vector<1x32x32xbf16> to vector<32x32xbf16>
    %cst_22 = arith.constant dense<0.000000e+00> : vector<1x32xf32>
    %45 = tpu.matmul %42, %44, %cst_22 {dimension_numbers = #tpu.dot_dimension_numbers<[1], [0], [0], [1], [0, 0, 1, 1], [], []>} : vector<1x32xbf16>, vector<32x32xbf16>, vector<1x32xf32> -> vector<1x32xf32>
    %46 = vector.shape_cast %45 : vector<1x32xf32> to vector<1x1x32xf32>
    %c0_23 = arith.constant 0 : index
    %c0_24 = arith.constant 0 : index
    %c0_25 = arith.constant 0 : index
    %47 = vector.load %arg3[%c0_23, %c0_24, %c0_25] : memref<1x16x32xbf16, #tpu.memory_space<vmem>>, vector<1x16x32xbf16>
    %48 = vector.extract_strided_slice %1 {offsets = [2, 0, 0], sizes = [1, 1, 32], strides = [1, 1, 1]} : vector<3x1x32xbf16> to vector<1x1x32xbf16>
    "tpu.trace_start"() <{level = 10 : i32, message = "bqd,bld->bql"}> : () -> ()
    %cst_26 = arith.constant dense<0.000000e+00> : vector<1x1x16xf32>
    %49 = tpu.matmul %48, %47, %cst_26 {dimension_numbers = #tpu.dot_dimension_numbers<[2], [2], [1], [1], [0, 0, 0, 1, 1, 1], [0], [0]>} : vector<1x1x32xbf16>, vector<1x16x32xbf16>, vector<1x1x16xf32> -> vector<1x1x16xf32>
    "tpu.trace_stop"() : () -> ()
    %50 = arith.addf %49, %0 : vector<1x1x16xf32>
    %cst_27 = arith.constant dense<0xFF800000> : vector<1x1xf32>
    %51 = vector.multi_reduction <maximumf>, %50, %cst_27 [2] : vector<1x1x16xf32> to vector<1x1xf32>
    %52 = vector.shape_cast %51 : vector<1x1xf32> to vector<1x1x1xf32>
    %53 = vector.broadcast %52 : vector<1x1x1xf32> to vector<1x1x16xf32>
    %54 = arith.subf %50, %53 : vector<1x1x16xf32>
    %55 = math.exp %54 : vector<1x1x16xf32>
    %cst_28 = arith.constant dense<0.000000e+00> : vector<1x1xf32>
    %56 = vector.multi_reduction <add>, %55, %cst_28 [2] : vector<1x1x16xf32> to vector<1x1xf32>
    %57 = vector.shape_cast %56 : vector<1x1xf32> to vector<1x1x1xf32>
    %58 = tpu.reciprocal %57 {approx = true} : vector<1x1x1xf32> -> vector<1x1x1xf32>
    %59 = vector.broadcast %58 : vector<1x1x1xf32> to vector<1x1x16xf32>
    %60 = arith.mulf %55, %59 : vector<1x1x16xf32>
    %61 = arith.truncf %60 : vector<1x1x16xf32> to vector<1x1x16xbf16>
    "tpu.trace_start"() <{level = 10 : i32, message = "bql,bld->bqd"}> : () -> ()
    %cst_29 = arith.constant dense<0.000000e+00> : vector<1x1x32xf32>
    %62 = tpu.matmul %61, %47, %cst_29 {dimension_numbers = #tpu.dot_dimension_numbers<[2], [1], [1], [2], [0, 0, 0, 1, 1, 2], [0], [0]>} : vector<1x1x16xbf16>, vector<1x16x32xbf16>, vector<1x1x32xf32> -> vector<1x1x32xf32>
    "tpu.trace_stop"() : () -> ()
    %63 = vector.shape_cast %62 : vector<1x1x32xf32> to vector<1x32xf32>
    %64 = arith.truncf %63 : vector<1x32xf32> to vector<1x32xbf16>
    %65 = vector.extract_strided_slice %2 {offsets = [2, 0, 0], sizes = [1, 32, 32], strides = [1, 1, 1]} : vector<3x32x32xbf16> to vector<1x32x32xbf16>
    %66 = vector.shape_cast %65 : vector<1x32x32xbf16> to vector<32x32xbf16>
    %cst_30 = arith.constant dense<0.000000e+00> : vector<1x32xf32>
    %67 = tpu.matmul %64, %66, %cst_30 {dimension_numbers = #tpu.dot_dimension_numbers<[1], [0], [0], [1], [0, 0, 1, 1], [], []>} : vector<1x32xbf16>, vector<32x32xbf16>, vector<1x32xf32> -> vector<1x32xf32>
    %68 = vector.shape_cast %67 : vector<1x32xf32> to vector<1x1x32xf32>
    %69 = tpu.concatenate %24, %46, %68 in 1 : vector<1x1x32xf32>, vector<1x1x32xf32>, vector<1x1x32xf32> -> vector<1x3x32xf32>
    %c0_31 = arith.constant 0 : index
    %c0_32 = arith.constant 0 : index
    %c0_33 = arith.constant 0 : index
    %70 = vector.load %arg7[%c0_31, %c0_32, %c0_33] : memref<1x3x32xf32, #tpu.memory_space<vmem>>, vector<1x3x32xf32>
    tpu.vector_store %arg7[%c0_31, %c0_32, %c0_33], %69 {strides = array<i32>} : memref<1x3x32xf32, #tpu.memory_space<vmem>>, vector<1x3x32xf32>,
    return
  }
  func.func @transform_0(%arg0: i32) -> (i32, i32, i32) {
    %c0_i32 = arith.constant 0 : i32
    %c0_i32_0 = arith.constant 0 : i32
    %c0_i32_1 = arith.constant 0 : i32
    return %arg0, %c0_i32, %c0_i32_0 : i32, i32, i32
  }
  func.func @transform_1(%arg0: i32) -> (i32, i32, i32) {
    %c0_i32 = arith.constant 0 : i32
    %c0_i32_0 = arith.constant 0 : i32
    %c0_i32_1 = arith.constant 0 : i32
    return %arg0, %c0_i32, %c0_i32_0 : i32, i32, i32
  }
  func.func @transform_2(%arg0: i32) -> (i32, i32, i32) {
    %c0_i32 = arith.constant 0 : i32
    %c0_i32_0 = arith.constant 0 : i32
    %c0_i32_1 = arith.constant 0 : i32
    return %arg0, %c0_i32, %c0_i32_0 : i32, i32, i32
  }
  func.func @transform_3(%arg0: i32) -> (i32, i32, i32) {
    %c0_i32 = arith.constant 0 : i32
    %c0_i32_0 = arith.constant 0 : i32
    %c0_i32_1 = arith.constant 0 : i32
    return %arg0, %c0_i32, %c0_i32_0 : i32, i32, i32
  }
  func.func @transform_4(%arg0: i32) -> (i32, i32, i32) {
    %c0_i32 = arith.constant 0 : i32
    %c0_i32_0 = arith.constant 0 : i32
    %c0_i32_1 = arith.constant 0 : i32
    %c0_i32_2 = arith.constant 0 : i32
    return %c0_i32, %c0_i32_0, %c0_i32_1 : i32, i32, i32
  }
  func.func @transform_5(%arg0: i32) -> (i32, i32, i32) {
    %c0_i32 = arith.constant 0 : i32
    %c0_i32_0 = arith.constant 0 : i32
    %c0_i32_1 = arith.constant 0 : i32
    %c0_i32_2 = arith.constant 0 : i32
    return %c0_i32, %c0_i32_0, %c0_i32_1 : i32, i32, i32
  }
  func.func @transform_6(%arg0: i32) -> (i32, i32, i32) {
    %c0_i32 = arith.constant 0 : i32
    %c0_i32_0 = arith.constant 0 : i32
    %c0_i32_1 = arith.constant 0 : i32
    return %arg0, %c0_i32, %c0_i32_0 : i32, i32, i32
  }
}

</mosaic_0001>

<llo_original>
// kernel: tpu_custom_call.1
$region0: #{tpu_custom_call.1}
  #allocation0 [shape = 'u32[]', space=smem, size = 0x4, offset = 0x4, fixed_abs, tag = 'smem constant byte address 0x4 - core index']
  #allocation1 [shape = 'u32[72,128]{1,0:T(1,128)}', space=vmem, size = 0x9000, scoped, tag = 'internal scratch']
  %s0 = inlined_call_operand.hbm [shape: bf16[2,16,32], index: 0, kind: input, shape index: {}]
  %s1 = inlined_call_operand.hbm [shape: bf16[2,16,32], index: 1, kind: input, shape index: {}]
  %s2 = inlined_call_operand.hbm [shape: bf16[2,16,32], index: 2, kind: input, shape index: {}]
  %s3 = inlined_call_operand.vmem [shape: f32[2,1,16], index: 3, kind: input, shape index: {}]
  %s4 = inlined_call_operand.vmem [shape: bf16[3,1,32], index: 4, kind: input, shape index: {}]
  %s5 = inlined_call_operand.hbm [shape: bf16[3,32,32], index: 5, kind: input, shape index: {}]
  %s6 = inlined_call_operand.vmem [shape: f32[2,3,32], index: 6, kind: output, shape index: {}]
  %s7 = sld [smem:[#allocation0]]
  $region73: #{tpu_custom_call.1} parent=0
    _
  %s9 = ssub.s32 1, %s7
  %s10 = scalar_select 0, %s9, %s7
  $region1: #{tpu_custom_call.1} parent=0
    #allocation2 [shape = 'u8[8192]{0}', space=vmem, size = 0x2000, scoped, tag = 'input window, operand 0']
    #allocation3 [shape = 's32[2]{0}', space=sflag, size = 0x8, scoped, tag = 'scoped memory for tpu_custom_call.1']
    #allocation4 [shape = 'u8[8192]{0}', space=vmem, size = 0x2000, scoped, tag = 'input window, operand 1']
    #allocation5 [shape = 's32[2]{0}', space=sflag, size = 0x8, scoped, tag = 'scoped memory for tpu_custom_call.1']
    #allocation6 [shape = 'u8[8192]{0}', space=vmem, size = 0x2000, scoped, tag = 'input window, operand 2']
    #allocation7 [shape = 'u8[24576]{0}', space=vmem, size = 0x6000, scoped, tag = 'input window, operand 5, single buffered']
    #allocation8 [shape = 's32[1]{0}', space=sflag, size = 0x4, scoped, tag = 'scoped memory for tpu_custom_call.1']
    %11 = vsyncpa [#allocation3], 0
    %s12 = scalar_lea.sflag [#allocation3], 1
    %13 = vsyncpa %s12, 0
    %14 = vsyncpa [#allocation5], 0
    %s15 = scalar_lea.sflag [#allocation5], 1
    %16 = vsyncpa %s15, 0
    %17 = vsyncpa [#allocation8], 0
    loop: start=0, step=1, limit=4
    $region2: #{tpu_custom_call.1} parent=1 // loop_pre_header
      _
    $region3: #{tpu_custom_call.1} parent=1 // loop_header
      %s19 = sphi 0, %s23
      %p20 = scmp.ge.s32.totalorder %s19, 4
      %s29 = sphi 0, %s31
      %s32 = sphi 0, %s29
      %s33 = sphi 0, %s32
      %s49 = sphi 0, %s33
      %s55 = sphi 0, %s57
      %s58 = sphi 0, %s55
      %s59 = sphi 0, %s58
      %s75 = sphi 0, %s59
      %s81 = sphi 0, %s83
      %s84 = sphi 0, %s81
      %s85 = sphi 0, %s84
      %s101 = sphi 0, %s85
      %s107 = sphi 0, %s109
      %s110 = sphi 0, %s107
      %s111 = sphi 0, %s110
      %s127 = sphi 0, %s111
      %s131 = sphi 0, %s131
      %s133 = sphi 0, %s131
      %s134 = sphi 0, %s133
      %s148 = sphi 0, %s134
      %s152 = sphi 0, %s152
      %s154 = sphi 0, %s152
      %s155 = sphi 0, %s154
      %s169 = sphi 0, %s155
      %s175 = sphi 0, %s177
      %s178 = sphi 0, %s175
      %s179 = sphi 0, %s178
      %s195 = sphi 0, %s179
    $region4: #{tpu_custom_call.1} parent=1 // loop_header_branch
      %22 = sbr.rel (%p20) target = $region8
    $region5: #{tpu_custom_call.1} parent=1 // loop_body
      %s24 = ssub.s32 %s19, 1
      %s25 = ssub.s32 %s19, 2
      %s26 = sadd.s32 %s19, 1
      %s27 = ssub.s32 %s19, %s26
      %p28 = scmp.eq.s32.totalorder %s27, 0
      %s30 = sadd.s32 %s29, 1
      %s31 = scalar_select %p28, %s29, %s30
      %p34 = pneg %p28
      %p35 = scmp.eq.s32.totalorder %s19, 1
      %p36 = por %p34, %p35
      %p37 = scmp.ne.s32.totalorder %s29, %s32
      %p38 = scmp.eq.s32.totalorder %s19, 0
      %p39 = por %p37, %p38
      %p40 = scmp.ne.s32.totalorder %s29, %s32
      %p41 = scmp.eq.s32.totalorder %s24, 1
      %p42 = por %p40, %p41
      %p43 = scmp.ne.s32.totalorder %s32, %s33
      %p44 = scmp.eq.s32.totalorder %s24, 0
      %p45 = por %p43, %p44
      %p46 = scmp.ne.s32.totalorder %s32, %s33
      %p47 = scmp.eq.s32.totalorder %s25, 1
      %p48 = por %p46, %p47
      %p50 = scmp.ne.s32.totalorder %s33, %s49
      %p51 = scmp.eq.s32.totalorder %s25, 0
      %p52 = por %p50, %p51
      %s53 = ssub.s32 %s19, %s26
      %p54 = scmp.eq.s32.totalorder %s53, 0
      %s56 = sadd.s32 %s55, 1
      %s57 = scalar_select %p54, %s55, %s56
      %p60 = pneg %p54
      %p61 = scmp.eq.s32.totalorder %s19, 1
      %p62 = por %p60, %p61
      %p63 = scmp.ne.s32.totalorder %s55, %s58
      %p64 = scmp.eq.s32.totalorder %s19, 0
      %p65 = por %p63, %p64
      %p66 = scmp.ne.s32.totalorder %s55, %s58
      %p67 = scmp.eq.s32.totalorder %s24, 1
      %p68 = por %p66, %p67
      %p69 = scmp.ne.s32.totalorder %s58, %s59
      %p70 = scmp.eq.s32.totalorder %s24, 0
      %p71 = por %p69, %p70
      %p72 = scmp.ne.s32.totalorder %s58, %s59
      %p73 = scmp.eq.s32.totalorder %s25, 1
      %p74 = por %p72, %p73
      %p76 = scmp.ne.s32.totalorder %s59, %s75
      %p77 = scmp.eq.s32.totalorder %s25, 0
      %p78 = por %p76, %p77
      %s79 = ssub.s32 %s19, %s26
      %p80 = scmp.eq.s32.totalorder %s79, 0
      %s82 = sadd.s32 %s81, 1
      %s83 = scalar_select %p80, %s81, %s82
      %p86 = pneg %p80
      %p87 = scmp.eq.s32.totalorder %s19, 1
      %p88 = por %p86, %p87
      %p89 = scmp.ne.s32.totalorder %s81, %s84
      %p90 = scmp.eq.s32.totalorder %s19, 0
      %p91 = por %p89, %p90
      %p92 = scmp.ne.s32.totalorder %s81, %s84
      %p93 = scmp.eq.s32.totalorder %s24, 1
      %p94 = por %p92, %p93
      %p95 = scmp.ne.s32.totalorder %s84, %s85
      %p96 = scmp.eq.s32.totalorder %s24, 0
      %p97 = por %p95, %p96
      %p98 = scmp.ne.s32.totalorder %s84, %s85
      %p99 = scmp.eq.s32.totalorder %s25, 1
      %p100 = por %p98, %p99
      %p102 = scmp.ne.s32.totalorder %s85, %s101
      %p103 = scmp.eq.s32.totalorder %s25, 0
      %p104 = por %p102, %p103
      %s105 = ssub.s32 %s19, %s26
      %p106 = scmp.eq.s32.totalorder %s105, 0
      %s108 = sadd.s32 %s107, 1
      %s109 = scalar_select %p106, %s107, %s108
      %p112 = pneg %p106
      %p113 = scmp.eq.s32.totalorder %s19, 1
      %p114 = por %p112, %p113
      %p115 = scmp.ne.s32.totalorder %s107, %s110
      %p116 = scmp.eq.s32.totalorder %s19, 0
      %p117 = por %p115, %p116
      %p118 = scmp.ne.s32.totalorder %s107, %s110
      %p119 = scmp.eq.s32.totalorder %s24, 1
      %p120 = por %p118, %p119
      %p121 = scmp.ne.s32.totalorder %s110, %s111
      %p122 = scmp.eq.s32.totalorder %s24, 0
      %p123 = por %p121, %p122
      %p124 = scmp.ne.s32.totalorder %s110, %s111
      %p125 = scmp.eq.s32.totalorder %s25, 1
      %p126 = por %p124, %p125
      %p128 = scmp.ne.s32.totalorder %s111, %s127
      %p129 = scmp.eq.s32.totalorder %s25, 0
      %p130 = por %p128, %p129
      %s132 = sadd.s32 %s131, 1
      %p135 = scmp.eq.s32.totalorder %s19, 1
      %p136 = scmp.ne.s32.totalorder %s131, %s133
      %p137 = scmp.eq.s32.totalorder %s19, 0
      %p138 = por %p136, %p137
      %p139 = scmp.ne.s32.totalorder %s131, %s133
      %p140 = scmp.eq.s32.totalorder %s24, 1
      %p141 = por %p139, %p140
      %p142 = scmp.ne.s32.totalorder %s133, %s134
      %p143 = scmp.eq.s32.totalorder %s24, 0
      %p144 = por %p142, %p143
      %p145 = scmp.ne.s32.totalorder %s133, %s134
      %p146 = scmp.eq.s32.totalorder %s25, 1
      %p147 = por %p145, %p146
      %p149 = scmp.ne.s32.totalorder %s134, %s148
      %p150 = scmp.eq.s32.totalorder %s25, 0
      %p151 = por %p149, %p150
      %s153 = sadd.s32 %s152, 1
      %p156 = scmp.eq.s32.totalorder %s19, 1
      %p157 = scmp.ne.s32.totalorder %s152, %s154
      %p158 = scmp.eq.s32.totalorder %s19, 0
      %p159 = por %p157, %p158
      %p160 = scmp.ne.s32.totalorder %s152, %s154
      %p161 = scmp.eq.s32.totalorder %s24, 1
      %p162 = por %p160, %p161
      %p163 = scmp.ne.s32.totalorder %s154, %s155
      %p164 = scmp.eq.s32.totalorder %s24, 0
      %p165 = por %p163, %p164
      %p166 = scmp.ne.s32.totalorder %s154, %s155
      %p167 = scmp.eq.s32.totalorder %s25, 1
      %p168 = por %p166, %p167
      %p170 = scmp.ne.s32.totalorder %s155, %s169
      %p171 = scmp.eq.s32.totalorder %s25, 0
      %p172 = por %p170, %p171
      %s173 = ssub.s32 %s19, %s26
      %p174 = scmp.eq.s32.totalorder %s173, 0
      %s176 = sadd.s32 %s175, 1
      %s177 = scalar_select %p174, %s175, %s176
      %p180 = pneg %p174
      %p181 = scmp.eq.s32.totalorder %s19, 1
      %p182 = por %p180, %p181
      %p183 = scmp.ne.s32.totalorder %s175, %s178
      %p184 = scmp.eq.s32.totalorder %s19, 0
      %p185 = por %p183, %p184
      %p186 = scmp.ne.s32.totalorder %s175, %s178
      %p187 = scmp.eq.s32.totalorder %s24, 1
      %p188 = por %p186, %p187
      %p189 = scmp.ne.s32.totalorder %s178, %s179
      %p190 = scmp.eq.s32.totalorder %s24, 0
      %p191 = por %p189, %p190
      %p192 = scmp.ne.s32.totalorder %s178, %s179
      %p193 = scmp.eq.s32.totalorder %s25, 1
      %p194 = por %p192, %p193
      %p196 = scmp.ne.s32.totalorder %s179, %s195
      %p197 = scmp.eq.s32.totalorder %s25, 0
      %p198 = por %p196, %p197
      %p199 = scmp.le.s32.totalorder 1, %s19
      %p200 = scmp.lt.s32.totalorder %s19, 3
      %p201 = pnand %p199, %p200
      %p202 = pneg %p201
      // Predicated region
      $region9: #{tpu_custom_call.1} parent=5 // pred_check
        _
      $region10: #{tpu_custom_call.1} parent=5 // pred_check_branch
        %204 = sbr.rel (%p201) target = $region12
      $region11: #{tpu_custom_call.1} parent=5 // pred_region
        %s205 = ssub.s32 %s19, 1
        // Predicated region
        $region13: #{tpu_custom_call.1} parent=11 // pred_check
          %p206 = pneg %p144
        $region14: #{tpu_custom_call.1} parent=11 // pred_check_branch
          %208 = sbr.rel (%p206) target = $region16
        $region15: #{tpu_custom_call.1} parent=11 // pred_region
          _
        $region16: #{tpu_custom_call.1} parent=11 // pred_fallthru
          _
        // Predicated region
        $region17: #{tpu_custom_call.1} parent=11 // pred_check
          %p209 = pneg %p165
        $region18: #{tpu_custom_call.1} parent=11 // pred_check_branch
          %211 = sbr.rel (%p209) target = $region20
        $region19: #{tpu_custom_call.1} parent=11 // pred_region
          %213 = vsyncadd [#allocation8], 0
          %s214 = sshll.u32 %s5, 4
          %s215 = int_to_ptr.hbm [resolvable:$true] %s214
          %s216 = sshll.u32 [#allocation7], 4
          %s217 = int_to_ptr.vmem [resolvable:$true] %s216
          %222 = dma.hbm_to_vmem [thread:$0]  %s215, 768, %s217, [#allocation8], 64, 64, 4
        $region20: #{tpu_custom_call.1} parent=11 // pred_fallthru
          _
      $region12: #{tpu_custom_call.1} parent=5 // pred_fallthru
        _
      %p223 = scmp.lt.s32.totalorder %s19, 2
      // Predicated region
      $region21: #{tpu_custom_call.1} parent=5 // pred_check
        %p224 = pneg %p223
      $region22: #{tpu_custom_call.1} parent=5 // pred_check_branch
        %226 = sbr.rel (%p224) target = $region24
      $region23: #{tpu_custom_call.1} parent=5 // pred_region
        // Predicated region
        $region25: #{tpu_custom_call.1} parent=23 // pred_check
          %p227 = pneg %p39
        $region26: #{tpu_custom_call.1} parent=23 // pred_check_branch
          %229 = sbr.rel (%p227) target = $region28
        $region27: #{tpu_custom_call.1} parent=23 // pred_region
          %s230 = sand.u32 %s29, 1
          %s231 = scalar_lea.sflag [#allocation3], %s230
          %s232 = sand.u32 %s29, 1
          %s233 = smul.addr %s232, 8
          %s234 = scalar_lea.vmem [#allocation2], %s233
          %236 = vsyncadd %s231, 0
          %s237 = smul.addr %s19, 2
          %s238 = smul.addr %s237, 4
          %s239 = scalar_lea.hbm %s0, %s238
          %s240 = sshll.u32 %s239, 4
          %s241 = int_to_ptr.hbm [resolvable:$true] %s240
          %s242 = sshll.u32 %s234, 4
          %s243 = int_to_ptr.vmem [resolvable:$true] %s242
          %248 = dma.hbm_to_vmem [thread:$0]  %s241, 128, %s243, %s231, 64, 64, 4
        $region28: #{tpu_custom_call.1} parent=23 // pred_fallthru
          _
        // Predicated region
        $region29: #{tpu_custom_call.1} parent=23 // pred_check
          %p249 = pneg %p65
        $region30: #{tpu_custom_call.1} parent=23 // pred_check_branch
          %251 = sbr.rel (%p249) target = $region32
        $region31: #{tpu_custom_call.1} parent=23 // pred_region
          %s252 = sand.u32 %s19, 1
          %s253 = scalar_lea.sflag [#allocation5], %s252
          %s254 = sand.u32 %s55, 1
          %s255 = smul.addr %s254, 8
          %s256 = scalar_lea.vmem [#allocation4], %s255
          %258 = vsyncadd %s253, 0
          %s259 = smul.addr %s19, 2
          %s260 = smul.addr %s259, 4
          %s261 = scalar_lea.hbm %s1, %s260
          %s262 = sshll.u32 %s261, 4
          %s263 = int_to_ptr.hbm [resolvable:$true] %s262
          %s264 = sshll.u32 %s256, 4
          %s265 = int_to_ptr.vmem [resolvable:$true] %s264
          %270 = dma.hbm_to_vmem [thread:$0]  %s263, 128, %s265, %s253, 64, 64, 4
        $region32: #{tpu_custom_call.1} parent=23 // pred_fallthru
          _
        // Predicated region
        $region33: #{tpu_custom_call.1} parent=23 // pred_check
          %p271 = pneg %p91
        $region34: #{tpu_custom_call.1} parent=23 // pred_check_branch
          %273 = sbr.rel (%p271) target = $region36
        $region35: #{tpu_custom_call.1} parent=23 // pred_region
          %s274 = sand.u32 %s19, 1
          %s275 = scalar_lea.sflag [#allocation5], %s274
          %s276 = sand.u32 %s81, 1
          %s277 = smul.addr %s276, 8
          %s278 = scalar_lea.vmem [#allocation6], %s277
          %280 = vsyncadd %s275, 0
          %s281 = smul.addr %s19, 2
          %s282 = smul.addr %s281, 4
          %s283 = scalar_lea.hbm %s2, %s282
          %s284 = sshll.u32 %s283, 4
          %s285 = int_to_ptr.hbm [resolvable:$true] %s284
          %s286 = sshll.u32 %s278, 4
          %s287 = int_to_ptr.vmem [resolvable:$true] %s286
          %292 = dma.hbm_to_vmem [thread:$0]  %s285, 128, %s287, %s275, 64, 64, 4
        $region36: #{tpu_custom_call.1} parent=23 // pred_fallthru
          _
        // Predicated region
        $region37: #{tpu_custom_call.1} parent=23 // pred_check
          %p293 = pneg %p117
        $region38: #{tpu_custom_call.1} parent=23 // pred_check_branch
          %295 = sbr.rel (%p293) target = $region40
        $region39: #{tpu_custom_call.1} parent=23 // pred_region
          %p296 = scmp.lt.s32.totalorder %s19, 1
          %s297 = scalar_select %p296, %s19, 1
          %s298 = scalar_lea.vmem %s3, %s297
        $region40: #{tpu_custom_call.1} parent=23 // pred_fallthru
          _
      $region24: #{tpu_custom_call.1} parent=5 // pred_fallthru
        _
      %p299 = scmp.le.s32.totalorder 1, %s19
      %p300 = scmp.lt.s32.totalorder %s19, 3
      %p301 = pnand %p299, %p300
      %p302 = pneg %p301
      // Predicated region
      $region41: #{tpu_custom_call.1} parent=5 // pred_check
        _
      $region42: #{tpu_custom_call.1} parent=5 // pred_check_branch
        %304 = sbr.rel (%p301) target = $region44
      $region43: #{tpu_custom_call.1} parent=5 // pred_region
        %s305 = ssub.s32 %s19, 1
        %s306 = sand.u32 %s32, 1
        %s307 = scalar_lea.sflag [#allocation3], %s306
        %s308 = sand.u32 %s32, 1
        %s309 = smul.addr %s308, 8
        %s310 = scalar_lea.vmem [#allocation2], %s309
        // Predicated region
        $region45: #{tpu_custom_call.1} parent=43 // pred_check
          %p311 = pneg %p45
        $region46: #{tpu_custom_call.1} parent=43 // pred_check_branch
          %313 = sbr.rel (%p311) target = $region48
        $region47: #{tpu_custom_call.1} parent=43 // pred_region
          %315 = dma.done %s307, 128
        $region48: #{tpu_custom_call.1} parent=43 // pred_fallthru
          _
        %s316 = sand.u32 %s24, 1
        %s317 = scalar_lea.sflag [#allocation5], %s316
        %s318 = sand.u32 %s58, 1
        %s319 = smul.addr %s318, 8
        %s320 = scalar_lea.vmem [#allocation4], %s319
        // Predicated region
        $region49: #{tpu_custom_call.1} parent=43 // pred_check
          %p321 = pneg %p71
        $region50: #{tpu_custom_call.1} parent=43 // pred_check_branch
          %323 = sbr.rel (%p321) target = $region52
        $region51: #{tpu_custom_call.1} parent=43 // pred_region
          %325 = dma.done %s317, 128
        $region52: #{tpu_custom_call.1} parent=43 // pred_fallthru
          _
        %s326 = sand.u32 %s24, 1
        %s327 = scalar_lea.sflag [#allocation5], %s326
        %s328 = sand.u32 %s84, 1
        %s329 = smul.addr %s328, 8
        %s330 = scalar_lea.vmem [#allocation6], %s329
        // Predicated region
        $region53: #{tpu_custom_call.1} parent=43 // pred_check
          %p331 = pneg %p97
        $region54: #{tpu_custom_call.1} parent=43 // pred_check_branch
          %333 = sbr.rel (%p331) target = $region56
        $region55: #{tpu_custom_call.1} parent=43 // pred_region
          %335 = dma.done %s327, 128
        $region56: #{tpu_custom_call.1} parent=43 // pred_fallthru
          _
        // Predicated region
        $region57: #{tpu_custom_call.1} parent=43 // pred_check
          %p336 = pneg %p165
        $region58: #{tpu_custom_call.1} parent=43 // pred_check_branch
          %338 = sbr.rel (%p336) target = $region60
        $region59: #{tpu_custom_call.1} parent=43 // pred_region
          %340 = dma.done [#allocation8], 768
        $region60: #{tpu_custom_call.1} parent=43 // pred_fallthru
          _
        %s341 = sand.u32 %s32, 1
        %s342 = scalar_lea.sflag [#allocation3], %s341
        %s343 = sand.u32 %s32, 1
        %s344 = smul.addr %s343, 8
        %s345 = scalar_lea.vmem [#allocation2], %s344
        %p346 = pneg %p45
        %p347 = pneg %p42
        %s348 = sand.u32 %s24, 1
        %s349 = scalar_lea.sflag [#allocation5], %s348
        %s350 = sand.u32 %s58, 1
        %s351 = smul.addr %s350, 8
        %s352 = scalar_lea.vmem [#allocation4], %s351
        %p353 = pneg %p71
        %p354 = pneg %p68
        %s355 = sand.u32 %s24, 1
        %s356 = scalar_lea.sflag [#allocation5], %s355
        %s357 = sand.u32 %s84, 1
        %s358 = smul.addr %s357, 8
        %s359 = scalar_lea.vmem [#allocation6], %s358
        %p360 = pneg %p97
        %p361 = pneg %p94
        %p362 = scmp.lt.s32.totalorder %s24, 1
        %s363 = scalar_select %p362, %s24, 1
        %s364 = scalar_lea.vmem %s3, %s363
        %p365 = pneg %p123
        %p366 = pneg %p120
        %p367 = pneg %p144
        %p368 = pneg %p141
        %p369 = pneg %p165
        %p370 = pneg %p162
        %p371 = pneg %p191
        %p372 = pneg %p188
        %p373 = scmp.lt.s32.totalorder %s24, 1
        %s374 = scalar_select %p373, %s24, 1
        %s375 = smul.addr %s374, 4
        %s376 = scalar_lea.vmem %s6, %s375
        %p377 = scmp.lt.s32.totalorder %s24, 1
        %s378 = scalar_select %p377, %s24, 1
        %s379 = scalar_lea.vmem %s3, %s378
        %p380 = scmp.lt.s32.totalorder %s24, 1
        %s381 = scalar_select %p380, %s24, 1
        %s382 = smul.addr %s381, 4
        %s383 = scalar_lea.vmem %s6, %s382
        %v385 = vld [vmem:[%s379] sm:$0x1]
        %v386 = vld [vmem:[%s4] sm:$0x1]
        %v387 = vld [vmem:[%s4 + $0x1] sm:$0x1]
        %v388 = vld [vmem:[%s4 + $0x2] sm:$0x1]
        %v389 = vld [vmem:[#allocation7] sm:$0xf]
        %v390 = vld [vmem:[#allocation7 + $0x4] sm:$0xf]
        %v391 = vld [vmem:[#allocation7 + $0x8] sm:$0xf]
        %v392 = vld [vmem:[#allocation7 + $0xc] sm:$0xf]
        %v393 = vld [vmem:[#allocation7 + $0x10] sm:$0xf]
        %v394 = vld [vmem:[#allocation7 + $0x14] sm:$0xf]
        %v395 = vld [vmem:[#allocation7 + $0x18] sm:$0xf]
        %v396 = vld [vmem:[#allocation7 + $0x1c] sm:$0xf]
        %v397 = vld [vmem:[#allocation7 + $0x20] sm:$0xf]
        %v398 = vld [vmem:[#allocation7 + $0x24] sm:$0xf]
        %v399 = vld [vmem:[#allocation7 + $0x28] sm:$0xf]
        %v400 = vld [vmem:[#allocation7 + $0x2c] sm:$0xf]
        %v401 = vld [vmem:[%s310] sm:$0xf]
        %v402 = vld [vmem:[%s310 + $0x4] sm:$0xf]
        %v405 = vunpack.c.l.b16 %v401
        %v406 = vunpack.c.l.b16 %v402
        %v407 = vpack.c.b16 %v406, %v405
        %vm408 = vcmask 261120
        %v410 = vsel %vm408, %v386, 0
        %v413 = vsel %vm408, %v407, 0
        %415 = vmatpush.bf16.xpose.msra.mxu0 0
        %416 = vmatpush.bf16.xpose.msra.mxu0 0
        %417 = vmatpush.bf16.xpose.msra.mxu0 0
        %418 = vmatpush.bf16.xpose.msra.mxu0 0
        %419 = vmatpush.bf16.xpose.msra.mxu0 0
        %420 = vmatpush.bf16.xpose.msra.mxu0 0
        %421 = vmatpush.bf16.xpose.msra.mxu0 0
        %422 = vmatpush.bf16.xpose.msra.mxu0 %v413
        %423 = vmatmul.bf16.gmra.mxu0 %v410
        %v424 = vpop.f32.mrf.mxu0
        %v425 = vadd.f32 %v385, %v424
        %v426 = vpop.f32.mrf.mxu0
        %427 = vdwg.mxu0
        %vm428 = vcmask 122880
        %v429 = vsel %vm428, %v425, -inf
        %430 = vmax.xlane.f32.xlu0 %v429
        %v431 = vpop.xlane.xlu0 %430
        %v432 = vsub.f32 %v425, %v431
        %v433 = vmul.f32 %v432, 1.442695
        %v434 = vpow.pop %v433
        %v435 = vsel %vm428, %v434, 0.0
        %436 = vadd.xlane.f32.xlu0 %v435
        %v437 = vpop.xlane.xlu0 %436
        %v438 = vrcp.pop %v437
        %v439 = vmul.f32 %v434, %v438
        %v440 = vpack.c.bf16 %v439, %v439
        %vm442 = vcmask 130048
        %v444 = vsel %vm442, %v440, 0
        %446 = vmatpush.bf16.msra.mxu0 0
        %447 = vmatpush.bf16.msra.mxu0 0
        %448 = vmatpush.bf16.msra.mxu0 0
        %449 = vmatpush.bf16.msra.mxu0 0
        %450 = vmatpush.bf16.msra.mxu0 0
        %451 = vmatpush.bf16.msra.mxu0 0
        %452 = vmatpush.bf16.msra.mxu0 0
        %453 = vmatpush.bf16.msra.mxu0 %v407
        %454 = vmatmul.bf16.gmra.mxu0 %v444
        %v455 = vpop.f32.mrf.mxu0
        %v456 = vadd.f32 0.0, %v455
        %v457 = vpop.f32.mrf.mxu0
        %458 = vdwg.mxu0
        %v459 = vpack.c.bf16 %v456, %v456
        %v464 = vunpack.c.l.b16 %v389
        %v465 = vunpack.c.l.b16 %v390
        %v466 = vunpack.c.l.b16 %v391
        %v467 = vunpack.c.l.b16 %v392
        %v468 = vpack.c.b16 %v465, %v464
        %v469 = vpack.c.b16 %v467, %v466
        %v473 = vsel %vm408, %v459, 0
        %475 = vmatpush.bf16.msra.mxu0 0
        %476 = vmatpush.bf16.msra.mxu0 0
        %477 = vmatpush.bf16.msra.mxu0 0
        %478 = vmatpush.bf16.msra.mxu0 0
        %479 = vmatpush.bf16.msra.mxu0 0
        %480 = vmatpush.bf16.msra.mxu0 0
        %481 = vmatpush.bf16.msra.mxu0 %v469
        %482 = vmatpush.bf16.msra.mxu0 %v468
        %483 = vmatmul.bf16.gmra.mxu0 %v473
        %v484 = vpop.f32.mrf.mxu0
        %v485 = vadd.f32 0.0, %v484
        %v486 = vpop.f32.mrf.mxu0
        %487 = vdwg.mxu0
        %v488 = vld [vmem:[%s320] sm:$0xf]
        %v489 = vld [vmem:[%s320 + $0x4] sm:$0xf]
        %v492 = vunpack.c.l.b16 %v488
        %v493 = vunpack.c.l.b16 %v489
        %v494 = vpack.c.b16 %v493, %v492
        %v496 = vsel %vm408, %v387, 0
        %v499 = vsel %vm408, %v494, 0
        %501 = vmatpush.bf16.xpose.msra.mxu0 0
        %502 = vmatpush.bf16.xpose.msra.mxu0 0
        %503 = vmatpush.bf16.xpose.msra.mxu0 0
        %504 = vmatpush.bf16.xpose.msra.mxu0 0
        %505 = vmatpush.bf16.xpose.msra.mxu0 0
        %506 = vmatpush.bf16.xpose.msra.mxu0 0
        %507 = vmatpush.bf16.xpose.msra.mxu0 0
        %508 = vmatpush.bf16.xpose.msra.mxu0 %v499
        %509 = vmatmul.bf16.gmra.mxu0 %v496
        %v510 = vpop.f32.mrf.mxu0
        %v511 = vadd.f32 %v385, %v510
        %v512 = vpop.f32.mrf.mxu0
        %513 = vdwg.mxu0
        %v514 = vsel %vm428, %v511, -inf
        %515 = vmax.xlane.f32.xlu0 %v514
        %v516 = vpop.xlane.xlu0 %515
        %v517 = vsub.f32 %v511, %v516
        %v518 = vmul.f32 %v517, 1.442695
        %v519 = vpow.pop %v518
        %v520 = vsel %vm428, %v519, 0.0
        %521 = vadd.xlane.f32.xlu0 %v520
        %v522 = vpop.xlane.xlu0 %521
        %v523 = vrcp.pop %v522
        %v524 = vmul.f32 %v519, %v523
        %v525 = vpack.c.bf16 %v524, %v524
        %v528 = vsel %vm442, %v525, 0
        %530 = vmatpush.bf16.msra.mxu0 0
        %531 = vmatpush.bf16.msra.mxu0 0
        %532 = vmatpush.bf16.msra.mxu0 0
        %533 = vmatpush.bf16.msra.mxu0 0
        %534 = vmatpush.bf16.msra.mxu0 0
        %535 = vmatpush.bf16.msra.mxu0 0
        %536 = vmatpush.bf16.msra.mxu0 0
        %537 = vmatpush.bf16.msra.mxu0 %v494
        %538 = vmatmul.bf16.gmra.mxu0 %v528
        %v539 = vpop.f32.mrf.mxu0
        %v540 = vadd.f32 0.0, %v539
        %v541 = vpop.f32.mrf.mxu0
        %542 = vdwg.mxu0
        %v543 = vpack.c.bf16 %v540, %v540
        %v548 = vunpack.c.l.b16 %v393
        %v549 = vunpack.c.l.b16 %v394
        %v550 = vunpack.c.l.b16 %v395
        %v551 = vunpack.c.l.b16 %v396
        %v552 = vpack.c.b16 %v549, %v548
        %v553 = vpack.c.b16 %v551, %v550
        %v557 = vsel %vm408, %v543, 0
        %559 = vmatpush.bf16.msra.mxu0 0
        %560 = vmatpush.bf16.msra.mxu0 0
        %561 = vmatpush.bf16.msra.mxu0 0
        %562 = vmatpush.bf16.msra.mxu0 0
        %563 = vmatpush.bf16.msra.mxu0 0
        %564 = vmatpush.bf16.msra.mxu0 0
        %565 = vmatpush.bf16.msra.mxu0 %v553
        %566 = vmatpush.bf16.msra.mxu0 %v552
        %567 = vmatmul.bf16.gmra.mxu0 %v557
        %v568 = vpop.f32.mrf.mxu0
        %v569 = vadd.f32 0.0, %v568
        %v570 = vpop.f32.mrf.mxu0
        %571 = vdwg.mxu0
        %v572 = vld [vmem:[%s330] sm:$0xf]
        %v573 = vld [vmem:[%s330 + $0x4] sm:$0xf]
        %v576 = vunpack.c.l.b16 %v572
        %v577 = vunpack.c.l.b16 %v573
        %v578 = vpack.c.b16 %v577, %v576
        %v580 = vsel %vm408, %v388, 0
        %v583 = vsel %vm408, %v578, 0
        %585 = vmatpush.bf16.xpose.msra.mxu0 0
        %586 = vmatpush.bf16.xpose.msra.mxu0 0
        %587 = vmatpush.bf16.xpose.msra.mxu0 0
        %588 = vmatpush.bf16.xpose.msra.mxu0 0
        %589 = vmatpush.bf16.xpose.msra.mxu0 0
        %590 = vmatpush.bf16.xpose.msra.mxu0 0
        %591 = vmatpush.bf16.xpose.msra.mxu0 0
        %592 = vmatpush.bf16.xpose.msra.mxu0 %v583
        %593 = vmatmul.bf16.gmra.mxu0 %v580
        %v594 = vpop.f32.mrf.mxu0
        %v595 = vadd.f32 %v385, %v594
        %v596 = vpop.f32.mrf.mxu0
        %597 = vdwg.mxu0
        %v598 = vsel %vm428, %v595, -inf
        %599 = vmax.xlane.f32.xlu0 %v598
        %v600 = vpop.xlane.xlu0 %599
        %v601 = vsub.f32 %v595, %v600
        %v602 = vmul.f32 %v601, 1.442695
        %v603 = vpow.pop %v602
        %v604 = vsel %vm428, %v603, 0.0
        %605 = vadd.xlane.f32.xlu0 %v604
        %v606 = vpop.xlane.xlu0 %605
        %v607 = vrcp.pop %v606
        %v608 = vmul.f32 %v603, %v607
        %v609 = vpack.c.bf16 %v608, %v608
        %v612 = vsel %vm442, %v609, 0
        %614 = vmatpush.bf16.msra.mxu0 0
        %615 = vmatpush.bf16.msra.mxu0 0
        %616 = vmatpush.bf16.msra.mxu0 0
        %617 = vmatpush.bf16.msra.mxu0 0
        %618 = vmatpush.bf16.msra.mxu0 0
        %619 = vmatpush.bf16.msra.mxu0 0
        %620 = vmatpush.bf16.msra.mxu0 0
        %621 = vmatpush.bf16.msra.mxu0 %v578
        %622 = vmatmul.bf16.gmra.mxu0 %v612
        %v623 = vpop.f32.mrf.mxu0
        %v624 = vadd.f32 0.0, %v623
        %v625 = vpop.f32.mrf.mxu0
        %626 = vdwg.mxu0
        %v627 = vpack.c.bf16 %v624, %v624
        %v632 = vunpack.c.l.b16 %v397
        %v633 = vunpack.c.l.b16 %v398
        %v634 = vunpack.c.l.b16 %v399
        %v635 = vunpack.c.l.b16 %v400
        %v636 = vpack.c.b16 %v633, %v632
        %v637 = vpack.c.b16 %v635, %v634
        %v641 = vsel %vm408, %v627, 0
        %643 = vmatpush.bf16.msra.mxu0 0
        %644 = vmatpush.bf16.msra.mxu0 0
        %645 = vmatpush.bf16.msra.mxu0 0
        %646 = vmatpush.bf16.msra.mxu0 0
        %647 = vmatpush.bf16.msra.mxu0 0
        %648 = vmatpush.bf16.msra.mxu0 0
        %649 = vmatpush.bf16.msra.mxu0 %v637
        %650 = vmatpush.bf16.msra.mxu0 %v636
        %651 = vmatmul.bf16.gmra.mxu0 %v641
        %v652 = vpop.f32.mrf.mxu0
        %v653 = vadd.f32 0.0, %v652
        %v654 = vpop.f32.mrf.mxu0
        %655 = vdwg.mxu0
        %v657 = vrot.slane %v569, 7
        %v660 = vrot.slane %v653, 6
        %vm662 = vcmask 1040384
        %v663 = vsel %vm662, %v485, %v657
        %vm664 = vcmask 1041408
        %v665 = vsel %vm664, %v663, %v660
        %vm666 = vcmask 256000
        %667 = vst.msk [vmem:[%s383] sm:$0x7] %vm666, %v665
        %p668 = scmp.lt.s32.totalorder %s24, 1
        %s669 = scalar_select %p668, %s24, 1
        %s670 = smul.addr %s669, 4
        %s671 = scalar_lea.vmem %s6, %s670
        // Predicated region
        $region61: #{tpu_custom_call.1} parent=43 // pred_check
          %p672 = pneg %p188
        $region62: #{tpu_custom_call.1} parent=43 // pred_check_branch
          %674 = sbr.rel (%p672) target = $region64
        $region63: #{tpu_custom_call.1} parent=43 // pred_region
          _
        $region64: #{tpu_custom_call.1} parent=43 // pred_fallthru
          _
      $region44: #{tpu_custom_call.1} parent=5 // pred_fallthru
        _
      %p675 = scmp.le.s32.totalorder 2, %s19
      // Predicated region
      $region65: #{tpu_custom_call.1} parent=5 // pred_check
        %p676 = pneg %p675
      $region66: #{tpu_custom_call.1} parent=5 // pred_check_branch
        %678 = sbr.rel (%p676) target = $region68
      $region67: #{tpu_custom_call.1} parent=5 // pred_region
        %s679 = ssub.s32 %s19, 2
        // Predicated region
        $region69: #{tpu_custom_call.1} parent=67 // pred_check
          %p680 = pneg %p194
        $region70: #{tpu_custom_call.1} parent=67 // pred_check_branch
          %682 = sbr.rel (%p680) target = $region72
        $region71: #{tpu_custom_call.1} parent=67 // pred_region
          %p683 = scmp.lt.s32.totalorder %s25, 1
          %s684 = scalar_select %p683, %s25, 1
          %s685 = smul.addr %s684, 4
          %s686 = scalar_lea.vmem %s6, %s685
        $region72: #{tpu_custom_call.1} parent=67 // pred_fallthru
          _
      $region68: #{tpu_custom_call.1} parent=5 // pred_fallthru
        _
    $region6: #{tpu_custom_call.1} parent=1 // loop_footer
      %s23 = sadd.s32 1, %s19
    $region7: #{tpu_custom_call.1} parent=1 // loop_footer_branch
      %18 = sbr.rel target = $region3
    $region8: #{tpu_custom_call.1} parent=1 // loop_exit
      _
    %687 = vsyncpa [#allocation3], 1
    %s688 = scalar_lea.sflag [#allocation3], 1
    %689 = vsyncpa %s688, 1
    %690 = vsyncpa [#allocation5], 1
    %s691 = scalar_lea.sflag [#allocation5], 1
    %692 = vsyncpa %s691, 1
    %693 = vsyncpa [#allocation8], 1

</llo_original>
